<compile_context>
chip_gen: v7x
topology: tpu7x:2x2x1
jax: 0.10.0
libtpu: 0.0.40
codegen_flags: <defaults>
</compile_context>

<pallas_src>
import functools

import jax
import jax.numpy as jnp
from jax import lax
from jax.experimental import pallas as pl
from jax.experimental.pallas import tpu as pltpu

VOCAB = 18570
EMB = 300
MAX_LEN = 8          # config.max_len (small demo value)
NUM_CLASSES = 5
BATCH = 2


def _fused_kernel(ids_ref,     # SMEM [B*MAX_LEN] int32 (scalar prefetch, 1-D)
                  table_ref,   # VMEM [VOCAB, MAX_LEN*NUM_CLASSES] f32 (resident)
                  b_ref,       # VMEM [1, NUM_CLASSES] f32
                  o_ref,       # VMEM [B_TILE, NUM_CLASSES] f32
                  *, b_tile, max_len, num_classes):
    width = max_len * num_classes
    base = pl.program_id(0) * (b_tile * max_len)

    # Trace-time constant masks built from a 2-D iota (TPU has no 1-D iota).
    col = lax.broadcasted_iota(jnp.int32, (1, width), 1)
    # t_masks[t][k] = 1 iff k in [t*C, (t+1)*C)
    t_masks = [((col >= t * num_classes) & (col < (t + 1) * num_classes))
               .astype(jnp.float32) for t in range(max_len)]
    # c_masks[c][k] = 1 iff k % C == c   (built as OR of equalities; no int div/mod)
    c_masks = []
    for c in range(num_classes):
        m = (col == c)
        for t in range(1, max_len):
            m = m | (col == (t * num_classes + c))
        c_masks.append(m.astype(jnp.float32))

    # --- 1) fused embedding + linear via the precomputed logit table ---------
    #     acc[r, t*C + c] = logit_table[ids[r, t], t*C + c]
    acc_rows = []
    for r in range(b_tile):                                  # static unroll
        acc = jnp.zeros((1, width), dtype=jnp.float32)
        for t in range(max_len):                             # static unroll
            tok = ids_ref[base + r * max_len + t]            # SMEM scalar
            row = table_ref[pl.ds(tok, 1), :]                # [1, width]
            acc = acc + row * t_masks[t]
        acc_rows.append(acc)
    acc_all = acc_rows[0] if b_tile == 1 else jnp.concatenate(acc_rows, axis=0)

    # --- 2) logits[r, c] = sum_t acc[r, t*C + c] + bias[c]  (exact f32, VPU/XLU) ---
    cols = [jnp.sum(acc_all * c_masks[c], axis=-1, keepdims=True)
            for c in range(num_classes)]
    logits = jnp.concatenate(cols, axis=-1) + b_ref[...]

    # --- 3) numerically stable softmax with EXACT division (perf review) -----
    m = jnp.max(logits, axis=-1, keepdims=True)
    e = jnp.exp(logits - m)
    o_ref[...] = (e / jnp.sum(e, axis=-1, keepdims=True)).astype(o_ref.dtype)


def prepare_logit_table(emb_table, fc_w, max_len, emb, num_classes):
    """One-time (init-time) exact algebraic fusion of Embedding + Linear:
    logit_table[v, t*C + c] = emb_table[v, :] . fc_w[c, t*emb:(t+1)*emb]."""
    vocab = emb_table.shape[0]
    w_cte = fc_w.reshape(num_classes, max_len, emb)                  # [C, T, E]
    table = jnp.einsum('ve,cte->vtc', emb_table, w_cte,
                       precision=jax.lax.Precision.HIGHEST,
                       preferred_element_type=jnp.float32)           # [V, T, C]
    return table.reshape(vocab, max_len * num_classes)               # [V, T*C]


def my_model_forward(x_ids, logit_table, bias, *, b_tile=None):
    """x_ids: [B, MAX_LEN] int32 -> [B, NUM_CLASSES] softmax probabilities."""
    B, max_len = x_ids.shape
    vocab, width = logit_table.shape
    num_classes = bias.shape[-1]
    assert width == max_len * num_classes

    if b_tile is None:
        # Demo batch -> one grid step.  For large B on v7x pick b_tile = B//2
        # (a multiple of 8) so both TensorCores run; on v5e/v6e keep b_tile=B.
        b_tile = B
    assert B % b_tile == 0, "batch must be divisible by b_tile (pad the batch)"
    grid = (B // b_tile,)

    ids_flat = x_ids.reshape(-1).astype(jnp.int32)   # 1-D -> minimal SMEM padding

    kernel = functools.partial(_fused_kernel, b_tile=b_tile,
                               max_len=max_len, num_classes=num_classes)

    return pl.pallas_call(
        kernel,
        out_shape=jax.ShapeDtypeStruct((B, num_classes), jnp.float32),
        grid_spec=pltpu.PrefetchScalarGridSpec(
            num_scalar_prefetch=1,                           # ids -> SMEM
            grid=grid,
            in_specs=[
                # whole logit table resident in VMEM (constant block index ->
                # fetched once, amortized over all batch grid steps)
                pl.BlockSpec((vocab, width), lambda i, ids: (0, 0)),
                pl.BlockSpec((1, num_classes), lambda i, ids: (0, 0)),
            ],
            out_specs=pl.BlockSpec((b_tile, num_classes), lambda i, ids: (i, 0)),
        ),
        compiler_params=pltpu.CompilerParams(
            dimension_semantics=("parallel",),               # batch axis (v7x 2-TC)
            vmem_limit_bytes=40 * 1024 * 1024,               # table (~9.1 MiB padded)
        ),                                                   # x2 buffers, with headroom
    )(ids_flat, logit_table, bias.reshape(1, num_classes))


if __name__ == "__main__":
    key = jax.random.PRNGKey(0)
    k_emb, k_w, k_b, k_x = jax.random.split(key, 4)

    # parameters (matching nn.Embedding / nn.Linear shapes)
    emb_table = jax.random.normal(k_emb, (VOCAB, EMB), dtype=jnp.float32)
    emb_table = emb_table.at[0].set(0.0)               # padding_idx=0

    K = MAX_LEN * EMB
    bound = 1.0 / float(K) ** 0.5
    fc_w = jax.random.uniform(k_w, (NUM_CLASSES, K), minval=-bound, maxval=bound,
                              dtype=jnp.float32)        # PyTorch layout [N, K]
    fc_b = jax.random.uniform(k_b, (NUM_CLASSES,), minval=-bound, maxval=bound,
                              dtype=jnp.float32)

    # init-time algebraic fusion (hoisted out of the per-call path; exact)
    logit_table = prepare_logit_table(emb_table, fc_w, MAX_LEN, EMB, NUM_CLASSES)

    x_ids = jax.random.randint(k_x, (BATCH, MAX_LEN), 0, VOCAB, dtype=jnp.int32)

    fwd = jax.jit(my_model_forward)
    out = jax.block_until_ready(fwd(x_ids, logit_table, fc_b))

    # pure-JAX reference (same semantics as the PyTorch module)
    x_flat = jnp.take(emb_table, x_ids, axis=0).reshape(BATCH, -1)
    logits_ref = jnp.dot(x_flat, fc_w.T,
                         precision=jax.lax.Precision.HIGHEST) + fc_b
    ref = jax.nn.softmax(logits_ref, axis=-1)

    assert out.shape == (BATCH, NUM_CLASSES)
    assert jnp.allclose(jnp.sum(out, axis=-1), 1.0, atol=1e-5)
    assert jnp.allclose(out, ref, atol=1e-4)

    print("KERNEL_OK")
</pallas_src>

<mosaic_0001>
module attributes {stable_mosaic.version = 11 : i64} {
  func.func @_fused_kernel(%arg0: i32, %arg1: memref<16xi32, #tpu.memory_space<smem>>, %arg2: memref<18570x40xf32, #tpu.memory_space<vmem>>, %arg3: memref<1x5xf32, #tpu.memory_space<vmem>>, %arg4: memref<2x5xf32, #tpu.memory_space<vmem>>) attributes {dimension_semantics = [#tpu.dimension_semantics<parallel>], iteration_bounds = array<i64: 1>, scalar_prefetch = 1 : i64, scratch_operands = 0 : i64, tpu.core_type = #tpu.core_type<tc>, window_params = [{pipeline_mode = #tpu.pipeline_mode<synchronous>, transform_indices = @transform_0, window_bounds = array<i64: 18570, 40>}, {pipeline_mode = #tpu.pipeline_mode<synchronous>, transform_indices = @transform_1, window_bounds = array<i64: 1, 5>}, {transform_indices = @transform_2, window_bounds = array<i64: 2, 5>}]} {
    %c16_i32 = arith.constant 16 : i32
    %0 = arith.muli %arg0, %c16_i32 : i32
    %1 = tpu.iota {dimensions = array<i32: 1>} : vector<1x40xi32>
    %c0_i32 = arith.constant 0 : i32
    %2 = vector.broadcast %c0_i32 : i32 to vector<1x40xi32>
    %3 = arith.cmpi sge, %1, %2 : vector<1x40xi32>
    %c5_i32 = arith.constant 5 : i32
    %4 = vector.broadcast %c5_i32 : i32 to vector<1x40xi32>
    %5 = arith.cmpi slt, %1, %4 : vector<1x40xi32>
    %6 = arith.andi %3, %5 : vector<1x40xi1>
    %7 = arith.extui %6 : vector<1x40xi1> to vector<1x40xi32>
    %8 = arith.sitofp %7 : vector<1x40xi32> to vector<1x40xf32>
    %c5_i32_0 = arith.constant 5 : i32
    %9 = vector.broadcast %c5_i32_0 : i32 to vector<1x40xi32>
    %10 = arith.cmpi sge, %1, %9 : vector<1x40xi32>
    %c10_i32 = arith.constant 10 : i32
    %11 = vector.broadcast %c10_i32 : i32 to vector<1x40xi32>
    %12 = arith.cmpi slt, %1, %11 : vector<1x40xi32>
    %13 = arith.andi %10, %12 : vector<1x40xi1>
    %14 = arith.extui %13 : vector<1x40xi1> to vector<1x40xi32>
    %15 = arith.sitofp %14 : vector<1x40xi32> to vector<1x40xf32>
    %c10_i32_1 = arith.constant 10 : i32
    %16 = vector.broadcast %c10_i32_1 : i32 to vector<1x40xi32>
    %17 = arith.cmpi sge, %1, %16 : vector<1x40xi32>
    %c15_i32 = arith.constant 15 : i32
    %18 = vector.broadcast %c15_i32 : i32 to vector<1x40xi32>
    %19 = arith.cmpi slt, %1, %18 : vector<1x40xi32>
    %20 = arith.andi %17, %19 : vector<1x40xi1>
    %21 = arith.extui %20 : vector<1x40xi1> to vector<1x40xi32>
    %22 = arith.sitofp %21 : vector<1x40xi32> to vector<1x40xf32>
    %c15_i32_2 = arith.constant 15 : i32
    %23 = vector.broadcast %c15_i32_2 : i32 to vector<1x40xi32>
    %24 = arith.cmpi sge, %1, %23 : vector<1x40xi32>
    %c20_i32 = arith.constant 20 : i32
    %25 = vector.broadcast %c20_i32 : i32 to vector<1x40xi32>
    %26 = arith.cmpi slt, %1, %25 : vector<1x40xi32>
    %27 = arith.andi %24, %26 : vector<1x40xi1>
    %28 = arith.extui %27 : vector<1x40xi1> to vector<1x40xi32>
    %29 = arith.sitofp %28 : vector<1x40xi32> to vector<1x40xf32>
    %c20_i32_3 = arith.constant 20 : i32
    %30 = vector.broadcast %c20_i32_3 : i32 to vector<1x40xi32>
    %31 = arith.cmpi sge, %1, %30 : vector<1x40xi32>
    %c25_i32 = arith.constant 25 : i32
    %32 = vector.broadcast %c25_i32 : i32 to vector<1x40xi32>
    %33 = arith.cmpi slt, %1, %32 : vector<1x40xi32>
    %34 = arith.andi %31, %33 : vector<1x40xi1>
    %35 = arith.extui %34 : vector<1x40xi1> to vector<1x40xi32>
    %36 = arith.sitofp %35 : vector<1x40xi32> to vector<1x40xf32>
    %c25_i32_4 = arith.constant 25 : i32
    %37 = vector.broadcast %c25_i32_4 : i32 to vector<1x40xi32>
    %38 = arith.cmpi sge, %1, %37 : vector<1x40xi32>
    %c30_i32 = arith.constant 30 : i32
    %39 = vector.broadcast %c30_i32 : i32 to vector<1x40xi32>
    %40 = arith.cmpi slt, %1, %39 : vector<1x40xi32>
    %41 = arith.andi %38, %40 : vector<1x40xi1>
    %42 = arith.extui %41 : vector<1x40xi1> to vector<1x40xi32>
    %43 = arith.sitofp %42 : vector<1x40xi32> to vector<1x40xf32>
    %c30_i32_5 = arith.constant 30 : i32
    %44 = vector.broadcast %c30_i32_5 : i32 to vector<1x40xi32>
    %45 = arith.cmpi sge, %1, %44 : vector<1x40xi32>
    %c35_i32 = arith.constant 35 : i32
    %46 = vector.broadcast %c35_i32 : i32 to vector<1x40xi32>
    %47 = arith.cmpi slt, %1, %46 : vector<1x40xi32>
    %48 = arith.andi %45, %47 : vector<1x40xi1>
    %49 = arith.extui %48 : vector<1x40xi1> to vector<1x40xi32>
    %50 = arith.sitofp %49 : vector<1x40xi32> to vector<1x40xf32>
    %c35_i32_6 = arith.constant 35 : i32
    %51 = vector.broadcast %c35_i32_6 : i32 to vector<1x40xi32>
    %52 = arith.cmpi sge, %1, %51 : vector<1x40xi32>
    %c40_i32 = arith.constant 40 : i32
    %53 = vector.broadcast %c40_i32 : i32 to vector<1x40xi32>
    %54 = arith.cmpi slt, %1, %53 : vector<1x40xi32>
    %55 = arith.andi %52, %54 : vector<1x40xi1>
    %56 = arith.extui %55 : vector<1x40xi1> to vector<1x40xi32>
    %57 = arith.sitofp %56 : vector<1x40xi32> to vector<1x40xf32>
    %c0_i32_7 = arith.constant 0 : i32
    %58 = vector.broadcast %c0_i32_7 : i32 to vector<1x40xi32>
    %59 = arith.cmpi eq, %1, %58 : vector<1x40xi32>
    %c5_i32_8 = arith.constant 5 : i32
    %60 = vector.broadcast %c5_i32_8 : i32 to vector<1x40xi32>
    %61 = arith.cmpi eq, %1, %60 : vector<1x40xi32>
    %62 = arith.ori %59, %61 : vector<1x40xi1>
    %c10_i32_9 = arith.constant 10 : i32
    %63 = vector.broadcast %c10_i32_9 : i32 to vector<1x40xi32>
    %64 = arith.cmpi eq, %1, %63 : vector<1x40xi32>
    %65 = arith.ori %62, %64 : vector<1x40xi1>
    %c15_i32_10 = arith.constant 15 : i32
    %66 = vector.broadcast %c15_i32_10 : i32 to vector<1x40xi32>
    %67 = arith.cmpi eq, %1, %66 : vector<1x40xi32>
    %68 = arith.ori %65, %67 : vector<1x40xi1>
    %c20_i32_11 = arith.constant 20 : i32
    %69 = vector.broadcast %c20_i32_11 : i32 to vector<1x40xi32>
    %70 = arith.cmpi eq, %1, %69 : vector<1x40xi32>
    %71 = arith.ori %68, %70 : vector<1x40xi1>
    %c25_i32_12 = arith.constant 25 : i32
    %72 = vector.broadcast %c25_i32_12 : i32 to vector<1x40xi32>
    %73 = arith.cmpi eq, %1, %72 : vector<1x40xi32>
    %74 = arith.ori %71, %73 : vector<1x40xi1>
    %c30_i32_13 = arith.constant 30 : i32
    %75 = vector.broadcast %c30_i32_13 : i32 to vector<1x40xi32>
    %76 = arith.cmpi eq, %1, %75 : vector<1x40xi32>
    %77 = arith.ori %74, %76 : vector<1x40xi1>
    %c35_i32_14 = arith.constant 35 : i32
    %78 = vector.broadcast %c35_i32_14 : i32 to vector<1x40xi32>
    %79 = arith.cmpi eq, %1, %78 : vector<1x40xi32>
    %80 = arith.ori %77, %79 : vector<1x40xi1>
    %81 = arith.extui %80 : vector<1x40xi1> to vector<1x40xi32>
    %82 = arith.sitofp %81 : vector<1x40xi32> to vector<1x40xf32>
    %c1_i32 = arith.constant 1 : i32
    %83 = vector.broadcast %c1_i32 : i32 to vector<1x40xi32>
    %84 = arith.cmpi eq, %1, %83 : vector<1x40xi32>
    %c6_i32 = arith.constant 6 : i32
    %85 = vector.broadcast %c6_i32 : i32 to vector<1x40xi32>
    %86 = arith.cmpi eq, %1, %85 : vector<1x40xi32>
    %87 = arith.ori %84, %86 : vector<1x40xi1>
    %c11_i32 = arith.constant 11 : i32
    %88 = vector.broadcast %c11_i32 : i32 to vector<1x40xi32>
    %89 = arith.cmpi eq, %1, %88 : vector<1x40xi32>
    %90 = arith.ori %87, %89 : vector<1x40xi1>
    %c16_i32_15 = arith.constant 16 : i32
    %91 = vector.broadcast %c16_i32_15 : i32 to vector<1x40xi32>
    %92 = arith.cmpi eq, %1, %91 : vector<1x40xi32>
    %93 = arith.ori %90, %92 : vector<1x40xi1>
    %c21_i32 = arith.constant 21 : i32
    %94 = vector.broadcast %c21_i32 : i32 to vector<1x40xi32>
    %95 = arith.cmpi eq, %1, %94 : vector<1x40xi32>
    %96 = arith.ori %93, %95 : vector<1x40xi1>
    %c26_i32 = arith.constant 26 : i32
    %97 = vector.broadcast %c26_i32 : i32 to vector<1x40xi32>
    %98 = arith.cmpi eq, %1, %97 : vector<1x40xi32>
    %99 = arith.ori %96, %98 : vector<1x40xi1>
    %c31_i32 = arith.constant 31 : i32
    %100 = vector.broadcast %c31_i32 : i32 to vector<1x40xi32>
    %101 = arith.cmpi eq, %1, %100 : vector<1x40xi32>
    %102 = arith.ori %99, %101 : vector<1x40xi1>
    %c36_i32 = arith.constant 36 : i32
    %103 = vector.broadcast %c36_i32 : i32 to vector<1x40xi32>
    %104 = arith.cmpi eq, %1, %103 : vector<1x40xi32>
    %105 = arith.ori %102, %104 : vector<1x40xi1>
    %106 = arith.extui %105 : vector<1x40xi1> to vector<1x40xi32>
    %107 = arith.sitofp %106 : vector<1x40xi32> to vector<1x40xf32>
    %c2_i32 = arith.constant 2 : i32
    %108 = vector.broadcast %c2_i32 : i32 to vector<1x40xi32>
    %109 = arith.cmpi eq, %1, %108 : vector<1x40xi32>
    %c7_i32 = arith.constant 7 : i32
    %110 = vector.broadcast %c7_i32 : i32 to vector<1x40xi32>
    %111 = arith.cmpi eq, %1, %110 : vector<1x40xi32>
    %112 = arith.ori %109, %111 : vector<1x40xi1>
    %c12_i32 = arith.constant 12 : i32
    %113 = vector.broadcast %c12_i32 : i32 to vector<1x40xi32>
    %114 = arith.cmpi eq, %1, %113 : vector<1x40xi32>
    %115 = arith.ori %112, %114 : vector<1x40xi1>
    %c17_i32 = arith.constant 17 : i32
    %116 = vector.broadcast %c17_i32 : i32 to vector<1x40xi32>
    %117 = arith.cmpi eq, %1, %116 : vector<1x40xi32>
    %118 = arith.ori %115, %117 : vector<1x40xi1>
    %c22_i32 = arith.constant 22 : i32
    %119 = vector.broadcast %c22_i32 : i32 to vector<1x40xi32>
    %120 = arith.cmpi eq, %1, %119 : vector<1x40xi32>
    %121 = arith.ori %118, %120 : vector<1x40xi1>
    %c27_i32 = arith.constant 27 : i32
    %122 = vector.broadcast %c27_i32 : i32 to vector<1x40xi32>
    %123 = arith.cmpi eq, %1, %122 : vector<1x40xi32>
    %124 = arith.ori %121, %123 : vector<1x40xi1>
    %c32_i32 = arith.constant 32 : i32
    %125 = vector.broadcast %c32_i32 : i32 to vector<1x40xi32>
    %126 = arith.cmpi eq, %1, %125 : vector<1x40xi32>
    %127 = arith.ori %124, %126 : vector<1x40xi1>
    %c37_i32 = arith.constant 37 : i32
    %128 = vector.broadcast %c37_i32 : i32 to vector<1x40xi32>
    %129 = arith.cmpi eq, %1, %128 : vector<1x40xi32>
    %130 = arith.ori %127, %129 : vector<1x40xi1>
    %131 = arith.extui %130 : vector<1x40xi1> to vector<1x40xi32>
    %132 = arith.sitofp %131 : vector<1x40xi32> to vector<1x40xf32>
    %c3_i32 = arith.constant 3 : i32
    %133 = vector.broadcast %c3_i32 : i32 to vector<1x40xi32>
    %134 = arith.cmpi eq, %1, %133 : vector<1x40xi32>
    %c8_i32 = arith.constant 8 : i32
    %135 = vector.broadcast %c8_i32 : i32 to vector<1x40xi32>
    %136 = arith.cmpi eq, %1, %135 : vector<1x40xi32>
    %137 = arith.ori %134, %136 : vector<1x40xi1>
    %c13_i32 = arith.constant 13 : i32
    %138 = vector.broadcast %c13_i32 : i32 to vector<1x40xi32>
    %139 = arith.cmpi eq, %1, %138 : vector<1x40xi32>
    %140 = arith.ori %137, %139 : vector<1x40xi1>
    %c18_i32 = arith.constant 18 : i32
    %141 = vector.broadcast %c18_i32 : i32 to vector<1x40xi32>
    %142 = arith.cmpi eq, %1, %141 : vector<1x40xi32>
    %143 = arith.ori %140, %142 : vector<1x40xi1>
    %c23_i32 = arith.constant 23 : i32
    %144 = vector.broadcast %c23_i32 : i32 to vector<1x40xi32>
    %145 = arith.cmpi eq, %1, %144 : vector<1x40xi32>
    %146 = arith.ori %143, %145 : vector<1x40xi1>
    %c28_i32 = arith.constant 28 : i32
    %147 = vector.broadcast %c28_i32 : i32 to vector<1x40xi32>
    %148 = arith.cmpi eq, %1, %147 : vector<1x40xi32>
    %149 = arith.ori %146, %148 : vector<1x40xi1>
    %c33_i32 = arith.constant 33 : i32
    %150 = vector.broadcast %c33_i32 : i32 to vector<1x40xi32>
    %151 = arith.cmpi eq, %1, %150 : vector<1x40xi32>
    %152 = arith.ori %149, %151 : vector<1x40xi1>
    %c38_i32 = arith.constant 38 : i32
    %153 = vector.broadcast %c38_i32 : i32 to vector<1x40xi32>
    %154 = arith.cmpi eq, %1, %153 : vector<1x40xi32>
    %155 = arith.ori %152, %154 : vector<1x40xi1>
    %156 = arith.extui %155 : vector<1x40xi1> to vector<1x40xi32>
    %157 = arith.sitofp %156 : vector<1x40xi32> to vector<1x40xf32>
    %c4_i32 = arith.constant 4 : i32
    %158 = vector.broadcast %c4_i32 : i32 to vector<1x40xi32>
    %159 = arith.cmpi eq, %1, %158 : vector<1x40xi32>
    %c9_i32 = arith.constant 9 : i32
    %160 = vector.broadcast %c9_i32 : i32 to vector<1x40xi32>
    %161 = arith.cmpi eq, %1, %160 : vector<1x40xi32>
    %162 = arith.ori %159, %161 : vector<1x40xi1>
    %c14_i32 = arith.constant 14 : i32
    %163 = vector.broadcast %c14_i32 : i32 to vector<1x40xi32>
    %164 = arith.cmpi eq, %1, %163 : vector<1x40xi32>
    %165 = arith.ori %162, %164 : vector<1x40xi1>
    %c19_i32 = arith.constant 19 : i32
    %166 = vector.broadcast %c19_i32 : i32 to vector<1x40xi32>
    %167 = arith.cmpi eq, %1, %166 : vector<1x40xi32>
    %168 = arith.ori %165, %167 : vector<1x40xi1>
    %c24_i32 = arith.constant 24 : i32
    %169 = vector.broadcast %c24_i32 : i32 to vector<1x40xi32>
    %170 = arith.cmpi eq, %1, %169 : vector<1x40xi32>
    %171 = arith.ori %168, %170 : vector<1x40xi1>
    %c29_i32 = arith.constant 29 : i32
    %172 = vector.broadcast %c29_i32 : i32 to vector<1x40xi32>
    %173 = arith.cmpi eq, %1, %172 : vector<1x40xi32>
    %174 = arith.ori %171, %173 : vector<1x40xi1>
    %c34_i32 = arith.constant 34 : i32
    %175 = vector.broadcast %c34_i32 : i32 to vector<1x40xi32>
    %176 = arith.cmpi eq, %1, %175 : vector<1x40xi32>
    %177 = arith.ori %174, %176 : vector<1x40xi1>
    %c39_i32 = arith.constant 39 : i32
    %178 = vector.broadcast %c39_i32 : i32 to vector<1x40xi32>
    %179 = arith.cmpi eq, %1, %178 : vector<1x40xi32>
    %180 = arith.ori %177, %179 : vector<1x40xi1>
    %181 = arith.extui %180 : vector<1x40xi1> to vector<1x40xi32>
    %182 = arith.sitofp %181 : vector<1x40xi32> to vector<1x40xf32>
    %cst = arith.constant 0.000000e+00 : f32
    %183 = vector.broadcast %cst : f32 to vector<1x40xf32>
    %c0_i32_16 = arith.constant 0 : i32
    %184 = arith.addi %0, %c0_i32_16 : i32
    %c0_i32_17 = arith.constant 0 : i32
    %185 = arith.addi %184, %c0_i32_17 : i32
    %186 = arith.index_cast %185 : i32 to index
    %187 = memref.load %arg1[%186] : memref<16xi32, #tpu.memory_space<smem>>
    %188 = arith.index_cast %187 : i32 to index
    %c0 = arith.constant 0 : index
    %189 = vector.load %arg2[%188, %c0] : memref<18570x40xf32, #tpu.memory_space<vmem>>, vector<1x40xf32>
    %190 = arith.mulf %189, %8 : vector<1x40xf32>
    %191 = arith.addf %183, %190 : vector<1x40xf32>
    %c0_i32_18 = arith.constant 0 : i32
    %192 = arith.addi %0, %c0_i32_18 : i32
    %c1_i32_19 = arith.constant 1 : i32
    %193 = arith.addi %192, %c1_i32_19 : i32
    %194 = arith.index_cast %193 : i32 to index
    %195 = memref.load %arg1[%194] : memref<16xi32, #tpu.memory_space<smem>>
    %196 = arith.index_cast %195 : i32 to index
    %c0_20 = arith.constant 0 : index
    %197 = vector.load %arg2[%196, %c0_20] : memref<18570x40xf32, #tpu.memory_space<vmem>>, vector<1x40xf32>
    %198 = arith.mulf %197, %15 : vector<1x40xf32>
    %199 = arith.addf %191, %198 : vector<1x40xf32>
    %c0_i32_21 = arith.constant 0 : i32
    %200 = arith.addi %0, %c0_i32_21 : i32
    %c2_i32_22 = arith.constant 2 : i32
    %201 = arith.addi %200, %c2_i32_22 : i32
    %202 = arith.index_cast %201 : i32 to index
    %203 = memref.load %arg1[%202] : memref<16xi32, #tpu.memory_space<smem>>
    %204 = arith.index_cast %203 : i32 to index
    %c0_23 = arith.constant 0 : index
    %205 = vector.load %arg2[%204, %c0_23] : memref<18570x40xf32, #tpu.memory_space<vmem>>, vector<1x40xf32>
    %206 = arith.mulf %205, %22 : vector<1x40xf32>
    %207 = arith.addf %199, %206 : vector<1x40xf32>
    %c0_i32_24 = arith.constant 0 : i32
    %208 = arith.addi %0, %c0_i32_24 : i32
    %c3_i32_25 = arith.constant 3 : i32
    %209 = arith.addi %208, %c3_i32_25 : i32
    %210 = arith.index_cast %209 : i32 to index
    %211 = memref.load %arg1[%210] : memref<16xi32, #tpu.memory_space<smem>>
    %212 = arith.index_cast %211 : i32 to index
    %c0_26 = arith.constant 0 : index
    %213 = vector.load %arg2[%212, %c0_26] : memref<18570x40xf32, #tpu.memory_space<vmem>>, vector<1x40xf32>
    %214 = arith.mulf %213, %29 : vector<1x40xf32>
    %215 = arith.addf %207, %214 : vector<1x40xf32>
    %c0_i32_27 = arith.constant 0 : i32
    %216 = arith.addi %0, %c0_i32_27 : i32
    %c4_i32_28 = arith.constant 4 : i32
    %217 = arith.addi %216, %c4_i32_28 : i32
    %218 = arith.index_cast %217 : i32 to index
    %219 = memref.load %arg1[%218] : memref<16xi32, #tpu.memory_space<smem>>
    %220 = arith.index_cast %219 : i32 to index
    %c0_29 = arith.constant 0 : index
    %221 = vector.load %arg2[%220, %c0_29] : memref<18570x40xf32, #tpu.memory_space<vmem>>, vector<1x40xf32>
    %222 = arith.mulf %221, %36 : vector<1x40xf32>
    %223 = arith.addf %215, %222 : vector<1x40xf32>
    %c0_i32_30 = arith.constant 0 : i32
    %224 = arith.addi %0, %c0_i32_30 : i32
    %c5_i32_31 = arith.constant 5 : i32
    %225 = arith.addi %224, %c5_i32_31 : i32
    %226 = arith.index_cast %225 : i32 to index
    %227 = memref.load %arg1[%226] : memref<16xi32, #tpu.memory_space<smem>>
    %228 = arith.index_cast %227 : i32 to index
    %c0_32 = arith.constant 0 : index
    %229 = vector.load %arg2[%228, %c0_32] : memref<18570x40xf32, #tpu.memory_space<vmem>>, vector<1x40xf32>
    %230 = arith.mulf %229, %43 : vector<1x40xf32>
    %231 = arith.addf %223, %230 : vector<1x40xf32>
    %c0_i32_33 = arith.constant 0 : i32
    %232 = arith.addi %0, %c0_i32_33 : i32
    %c6_i32_34 = arith.constant 6 : i32
    %233 = arith.addi %232, %c6_i32_34 : i32
    %234 = arith.index_cast %233 : i32 to index
    %235 = memref.load %arg1[%234] : memref<16xi32, #tpu.memory_space<smem>>
    %236 = arith.index_cast %235 : i32 to index
    %c0_35 = arith.constant 0 : index
    %237 = vector.load %arg2[%236, %c0_35] : memref<18570x40xf32, #tpu.memory_space<vmem>>, vector<1x40xf32>
    %238 = arith.mulf %237, %50 : vector<1x40xf32>
    %239 = arith.addf %231, %238 : vector<1x40xf32>
    %c0_i32_36 = arith.constant 0 : i32
    %240 = arith.addi %0, %c0_i32_36 : i32
    %c7_i32_37 = arith.constant 7 : i32
    %241 = arith.addi %240, %c7_i32_37 : i32
    %242 = arith.index_cast %241 : i32 to index
    %243 = memref.load %arg1[%242] : memref<16xi32, #tpu.memory_space<smem>>
    %244 = arith.index_cast %243 : i32 to index
    %c0_38 = arith.constant 0 : index
    %245 = vector.load %arg2[%244, %c0_38] : memref<18570x40xf32, #tpu.memory_space<vmem>>, vector<1x40xf32>
    %246 = arith.mulf %245, %57 : vector<1x40xf32>
    %247 = arith.addf %239, %246 : vector<1x40xf32>
    %cst_39 = arith.constant 0.000000e+00 : f32
    %248 = vector.broadcast %cst_39 : f32 to vector<1x40xf32>
    %c8_i32_40 = arith.constant 8 : i32
    %249 = arith.addi %0, %c8_i32_40 : i32
    %c0_i32_41 = arith.constant 0 : i32
    %250 = arith.addi %249, %c0_i32_41 : i32
    %251 = arith.index_cast %250 : i32 to index
    %252 = memref.load %arg1[%251] : memref<16xi32, #tpu.memory_space<smem>>
    %253 = arith.index_cast %252 : i32 to index
    %c0_42 = arith.constant 0 : index
    %254 = vector.load %arg2[%253, %c0_42] : memref<18570x40xf32, #tpu.memory_space<vmem>>, vector<1x40xf32>
    %255 = arith.mulf %254, %8 : vector<1x40xf32>
    %256 = arith.addf %248, %255 : vector<1x40xf32>
    %c8_i32_43 = arith.constant 8 : i32
    %257 = arith.addi %0, %c8_i32_43 : i32
    %c1_i32_44 = arith.constant 1 : i32
    %258 = arith.addi %257, %c1_i32_44 : i32
    %259 = arith.index_cast %258 : i32 to index
    %260 = memref.load %arg1[%259] : memref<16xi32, #tpu.memory_space<smem>>
    %261 = arith.index_cast %260 : i32 to index
    %c0_45 = arith.constant 0 : index
    %262 = vector.load %arg2[%261, %c0_45] : memref<18570x40xf32, #tpu.memory_space<vmem>>, vector<1x40xf32>
    %263 = arith.mulf %262, %15 : vector<1x40xf32>
    %264 = arith.addf %256, %263 : vector<1x40xf32>
    %c8_i32_46 = arith.constant 8 : i32
    %265 = arith.addi %0, %c8_i32_46 : i32
    %c2_i32_47 = arith.constant 2 : i32
    %266 = arith.addi %265, %c2_i32_47 : i32
    %267 = arith.index_cast %266 : i32 to index
    %268 = memref.load %arg1[%267] : memref<16xi32, #tpu.memory_space<smem>>
    %269 = arith.index_cast %268 : i32 to index
    %c0_48 = arith.constant 0 : index
    %270 = vector.load %arg2[%269, %c0_48] : memref<18570x40xf32, #tpu.memory_space<vmem>>, vector<1x40xf32>
    %271 = arith.mulf %270, %22 : vector<1x40xf32>
    %272 = arith.addf %264, %271 : vector<1x40xf32>
    %c8_i32_49 = arith.constant 8 : i32
    %273 = arith.addi %0, %c8_i32_49 : i32
    %c3_i32_50 = arith.constant 3 : i32
    %274 = arith.addi %273, %c3_i32_50 : i32
    %275 = arith.index_cast %274 : i32 to index
    %276 = memref.load %arg1[%275] : memref<16xi32, #tpu.memory_space<smem>>
    %277 = arith.index_cast %276 : i32 to index
    %c0_51 = arith.constant 0 : index
    %278 = vector.load %arg2[%277, %c0_51] : memref<18570x40xf32, #tpu.memory_space<vmem>>, vector<1x40xf32>
    %279 = arith.mulf %278, %29 : vector<1x40xf32>
    %280 = arith.addf %272, %279 : vector<1x40xf32>
    %c8_i32_52 = arith.constant 8 : i32
    %281 = arith.addi %0, %c8_i32_52 : i32
    %c4_i32_53 = arith.constant 4 : i32
    %282 = arith.addi %281, %c4_i32_53 : i32
    %283 = arith.index_cast %282 : i32 to index
    %284 = memref.load %arg1[%283] : memref<16xi32, #tpu.memory_space<smem>>
    %285 = arith.index_cast %284 : i32 to index
    %c0_54 = arith.constant 0 : index
    %286 = vector.load %arg2[%285, %c0_54] : memref<18570x40xf32, #tpu.memory_space<vmem>>, vector<1x40xf32>
    %287 = arith.mulf %286, %36 : vector<1x40xf32>
    %288 = arith.addf %280, %287 : vector<1x40xf32>
    %c8_i32_55 = arith.constant 8 : i32
    %289 = arith.addi %0, %c8_i32_55 : i32
    %c5_i32_56 = arith.constant 5 : i32
    %290 = arith.addi %289, %c5_i32_56 : i32
    %291 = arith.index_cast %290 : i32 to index
    %292 = memref.load %arg1[%291] : memref<16xi32, #tpu.memory_space<smem>>
    %293 = arith.index_cast %292 : i32 to index
    %c0_57 = arith.constant 0 : index
    %294 = vector.load %arg2[%293, %c0_57] : memref<18570x40xf32, #tpu.memory_space<vmem>>, vector<1x40xf32>
    %295 = arith.mulf %294, %43 : vector<1x40xf32>
    %296 = arith.addf %288, %295 : vector<1x40xf32>
    %c8_i32_58 = arith.constant 8 : i32
    %297 = arith.addi %0, %c8_i32_58 : i32
    %c6_i32_59 = arith.constant 6 : i32
    %298 = arith.addi %297, %c6_i32_59 : i32
    %299 = arith.index_cast %298 : i32 to index
    %300 = memref.load %arg1[%299] : memref<16xi32, #tpu.memory_space<smem>>
    %301 = arith.index_cast %300 : i32 to index
    %c0_60 = arith.constant 0 : index
    %302 = vector.load %arg2[%301, %c0_60] : memref<18570x40xf32, #tpu.memory_space<vmem>>, vector<1x40xf32>
    %303 = arith.mulf %302, %50 : vector<1x40xf32>
    %304 = arith.addf %296, %303 : vector<1x40xf32>
    %c8_i32_61 = arith.constant 8 : i32
    %305 = arith.addi %0, %c8_i32_61 : i32
    %c7_i32_62 = arith.constant 7 : i32
    %306 = arith.addi %305, %c7_i32_62 : i32
    %307 = arith.index_cast %306 : i32 to index
    %308 = memref.load %arg1[%307] : memref<16xi32, #tpu.memory_space<smem>>
    %309 = arith.index_cast %308 : i32 to index
    %c0_63 = arith.constant 0 : index
    %310 = vector.load %arg2[%309, %c0_63] : memref<18570x40xf32, #tpu.memory_space<vmem>>, vector<1x40xf32>
    %311 = arith.mulf %310, %57 : vector<1x40xf32>
    %312 = arith.addf %304, %311 : vector<1x40xf32>
    %313 = tpu.concatenate %247, %312 in 0 : vector<1x40xf32>, vector<1x40xf32> -> vector<2x40xf32>
    %314 = vector.broadcast %82 : vector<1x40xf32> to vector<2x40xf32>
    %315 = arith.mulf %313, %314 : vector<2x40xf32>
    %cst_64 = arith.constant dense<0.000000e+00> : vector<2xf32>
    %316 = vector.multi_reduction <add>, %315, %cst_64 [1] : vector<2x40xf32> to vector<2xf32>
    %317 = vector.shape_cast %316 : vector<2xf32> to vector<2x1xf32>
    %318 = vector.broadcast %107 : vector<1x40xf32> to vector<2x40xf32>
    %319 = arith.mulf %313, %318 : vector<2x40xf32>
    %cst_65 = arith.constant dense<0.000000e+00> : vector<2xf32>
    %320 = vector.multi_reduction <add>, %319, %cst_65 [1] : vector<2x40xf32> to vector<2xf32>
    %321 = vector.shape_cast %320 : vector<2xf32> to vector<2x1xf32>
    %322 = vector.broadcast %132 : vector<1x40xf32> to vector<2x40xf32>
    %323 = arith.mulf %313, %322 : vector<2x40xf32>
    %cst_66 = arith.constant dense<0.000000e+00> : vector<2xf32>
    %324 = vector.multi_reduction <add>, %323, %cst_66 [1] : vector<2x40xf32> to vector<2xf32>
    %325 = vector.shape_cast %324 : vector<2xf32> to vector<2x1xf32>
    %326 = vector.broadcast %157 : vector<1x40xf32> to vector<2x40xf32>
    %327 = arith.mulf %313, %326 : vector<2x40xf32>
    %cst_67 = arith.constant dense<0.000000e+00> : vector<2xf32>
    %328 = vector.multi_reduction <add>, %327, %cst_67 [1] : vector<2x40xf32> to vector<2xf32>
    %329 = vector.shape_cast %328 : vector<2xf32> to vector<2x1xf32>
    %330 = vector.broadcast %182 : vector<1x40xf32> to vector<2x40xf32>
    %331 = arith.mulf %313, %330 : vector<2x40xf32>
    %cst_68 = arith.constant dense<0.000000e+00> : vector<2xf32>
    %332 = vector.multi_reduction <add>, %331, %cst_68 [1] : vector<2x40xf32> to vector<2xf32>
    %333 = vector.shape_cast %332 : vector<2xf32> to vector<2x1xf32>
    %334 = tpu.concatenate %317, %321, %325, %329, %333 in 1 : vector<2x1xf32>, vector<2x1xf32>, vector<2x1xf32>, vector<2x1xf32>, vector<2x1xf32> -> vector<2x5xf32>
    %c0_69 = arith.constant 0 : index
    %c0_70 = arith.constant 0 : index
    %335 = vector.load %arg3[%c0_69, %c0_70] : memref<1x5xf32, #tpu.memory_space<vmem>>, vector<1x5xf32>
    %336 = vector.broadcast %335 : vector<1x5xf32> to vector<2x5xf32>
    %337 = arith.addf %334, %336 : vector<2x5xf32>
    %cst_71 = arith.constant dense<0xFF800000> : vector<2xf32>
    %338 = vector.multi_reduction <maximumf>, %337, %cst_71 [1] : vector<2x5xf32> to vector<2xf32>
    %339 = vector.shape_cast %338 : vector<2xf32> to vector<2x1xf32>
    %340 = vector.broadcast %339 : vector<2x1xf32> to vector<2x5xf32>
    %341 = arith.subf %337, %340 : vector<2x5xf32>
    %342 = math.exp %341 : vector<2x5xf32>
    %cst_72 = arith.constant dense<0.000000e+00> : vector<2xf32>
    %343 = vector.multi_reduction <add>, %342, %cst_72 [1] : vector<2x5xf32> to vector<2xf32>
    %344 = vector.shape_cast %343 : vector<2xf32> to vector<2x1xf32>
    %345 = vector.broadcast %344 : vector<2x1xf32> to vector<2x5xf32>
    %346 = arith.divf %342, %345 : vector<2x5xf32>
    %c0_73 = arith.constant 0 : index
    %c0_74 = arith.constant 0 : index
    %347 = vector.load %arg4[%c0_73, %c0_74] : memref<2x5xf32, #tpu.memory_space<vmem>>, vector<2x5xf32>
    tpu.vector_store %arg4[%c0_73, %c0_74], %346 {strides = array<i32>} : memref<2x5xf32, #tpu.memory_space<vmem>>, vector<2x5xf32>,
    return
  }
  func.func @transform_0(%arg0: i32, %arg1: memref<16xi32, #tpu.memory_space<smem>>) -> (i32, i32) {
    %c0_i32 = arith.constant 0 : i32
    %c0_i32_0 = arith.constant 0 : i32
    %c0_i32_1 = arith.constant 0 : i32
    return %c0_i32, %c0_i32_0 : i32, i32
  }
  func.func @transform_1(%arg0: i32, %arg1: memref<16xi32, #tpu.memory_space<smem>>) -> (i32, i32) {
    %c0_i32 = arith.constant 0 : i32
    %c0_i32_0 = arith.constant 0 : i32
    %c0_i32_1 = arith.constant 0 : i32
    return %c0_i32, %c0_i32_0 : i32, i32
  }
  func.func @transform_2(%arg0: i32, %arg1: memref<16xi32, #tpu.memory_space<smem>>) -> (i32, i32) {
    %c0_i32 = arith.constant 0 : i32
    %c0_i32_0 = arith.constant 0 : i32
    return %arg0, %c0_i32 : i32, i32
  }
}

</mosaic_0001>

<llo_original>
// kernel: my_model_forward.1
$region0: #{my_model_forward.1}
  #allocation0 [shape = 'u32[]', space=smem, size = 0x4, offset = 0x4, fixed_abs, tag = 'smem constant byte address 0x4 - core index']
  #allocation1 [shape = 'u32[144,128]{1,0:T(1,128)}', space=vmem, size = 0x12000, scoped, tag = 'internal scratch']
  #allocation2 [shape = 's32[1]{0}', space=sflag, size = 0x4, scoped, tag = 'scoped memory for my_model_forward.1']
  #allocation3 [shape = 'u8[512]{0}', space=smem, size = 0x200, scoped, tag = 'prefetched SMEM operand 0']
  %s0 = inlined_call_operand.vmem [shape: s32[16], index: 0, kind: input, shape index: {}]
  %s1 = inlined_call_operand.vmem [shape: f32[18570,40], index: 1, kind: input, shape index: {}]
  %s2 = inlined_call_operand.vmem [shape: f32[1,5], index: 2, kind: input, shape index: {}]
  %s3 = inlined_call_operand.hbm [shape: f32[2,5], index: 3, kind: output, shape index: {}]
  %s4 = sld [smem:[#allocation0]]
  $region18: #{my_model_forward.1} parent=0
    _
  %s6 = ssub.s32 1, %s4
  %s7 = scalar_select 0, %s6, %s4
  %s8 = sshll.u32 %s0, 4
  %s9 = int_to_ptr.vmem [resolvable:$true] %s8
  %11 = dma.vmem_to_smem %s9, 16, [#allocation3], [#allocation2]
  %12 = dma.done [#allocation2], 16
  %13 = sfence
  $region1: #{my_model_forward.1} parent=0
    #allocation4 [shape = 'u8[1024]{0}', space=vmem, size = 0x400, scoped, tag = 'output window, operand 0, single buffered']
    #allocation5 [shape = 's32[1]{0}', space=sflag, size = 0x4, scoped, tag = 'scoped memory for my_model_forward.1']
    %14 = vsyncpa [#allocation5], 0
    // Predicated region
    $region2: #{my_model_forward.1} parent=1 // pred_check
      _
    $region3: #{my_model_forward.1} parent=1 // pred_check_branch
      %16 = sbr.rel (0) target = $region5
    $region4: #{my_model_forward.1} parent=1 // pred_region
      _
    $region5: #{my_model_forward.1} parent=1 // pred_fallthru
      _
    // Predicated region
    $region6: #{my_model_forward.1} parent=1 // pred_check
      _
    $region7: #{my_model_forward.1} parent=1 // pred_check_branch
      %18 = sbr.rel (0) target = $region9
    $region8: #{my_model_forward.1} parent=1 // pred_region
      _
    $region9: #{my_model_forward.1} parent=1 // pred_fallthru
      _
    %s19 = smul.u32 0, 16
    %v20 = vlaneseq
    %v21 = vand.u32 %v20, 127
    %vm22 = vcmp.ge.s32.totalorder %v21, 0
    %vm23 = vcmp.lt.s32.totalorder %v21, 5
    %vm24 = vmand %vm22, %vm23
    %v25 = vsel %vm24, 1, 0
    %v26 = vcvt.s32.f32 %v25
    %vm27 = vcmp.ge.s32.totalorder %v21, 5
    %vm28 = vcmp.lt.s32.totalorder %v21, 10
    %vm29 = vmand %vm27, %vm28
    %v30 = vsel %vm29, 1, 0
    %v31 = vcvt.s32.f32 %v30
    %vm32 = vcmp.ge.s32.totalorder %v21, 10
    %vm33 = vcmp.lt.s32.totalorder %v21, 15
    %vm34 = vmand %vm32, %vm33
    %v35 = vsel %vm34, 1, 0
    %v36 = vcvt.s32.f32 %v35
    %vm37 = vcmp.ge.s32.totalorder %v21, 15
    %vm38 = vcmp.lt.s32.totalorder %v21, 20
    %vm39 = vmand %vm37, %vm38
    %v40 = vsel %vm39, 1, 0
    %v41 = vcvt.s32.f32 %v40
    %vm42 = vcmp.ge.s32.totalorder %v21, 20
    %vm43 = vcmp.lt.s32.totalorder %v21, 25
    %vm44 = vmand %vm42, %vm43
    %v45 = vsel %vm44, 1, 0
    %v46 = vcvt.s32.f32 %v45
    %vm47 = vcmp.ge.s32.totalorder %v21, 25
    %vm48 = vcmp.lt.s32.totalorder %v21, 30
    %vm49 = vmand %vm47, %vm48
    %v50 = vsel %vm49, 1, 0
    %v51 = vcvt.s32.f32 %v50
    %vm52 = vcmp.ge.s32.totalorder %v21, 30
    %vm53 = vcmp.lt.s32.totalorder %v21, 35
    %vm54 = vmand %vm52, %vm53
    %v55 = vsel %vm54, 1, 0
    %v56 = vcvt.s32.f32 %v55
    %vm57 = vcmp.ge.s32.totalorder %v21, 35
    %vm58 = vcmp.lt.s32.totalorder %v21, 40
    %vm59 = vmand %vm57, %vm58
    %v60 = vsel %vm59, 1, 0
    %v61 = vcvt.s32.f32 %v60
    %vm62 = vcmp.eq.s32.totalorder %v21, 0
    %vm63 = vcmp.eq.s32.totalorder %v21, 5
    %vm64 = vmor %vm62, %vm63
    %vm65 = vcmp.eq.s32.totalorder %v21, 10
    %vm66 = vmor %vm64, %vm65
    %vm67 = vcmp.eq.s32.totalorder %v21, 15
    %vm68 = vmor %vm66, %vm67
    %vm69 = vcmp.eq.s32.totalorder %v21, 20
    %vm70 = vmor %vm68, %vm69
    %vm71 = vcmp.eq.s32.totalorder %v21, 25
    %vm72 = vmor %vm70, %vm71
    %vm73 = vcmp.eq.s32.totalorder %v21, 30
    %vm74 = vmor %vm72, %vm73
    %vm75 = vcmp.eq.s32.totalorder %v21, 35
    %vm76 = vmor %vm74, %vm75
    %v77 = vsel %vm76, 1, 0
    %v78 = vcvt.s32.f32 %v77
    %vm79 = vcmp.eq.s32.totalorder %v21, 1
    %vm80 = vcmp.eq.s32.totalorder %v21, 6
    %vm81 = vmor %vm79, %vm80
    %vm82 = vcmp.eq.s32.totalorder %v21, 11
    %vm83 = vmor %vm81, %vm82
    %vm84 = vcmp.eq.s32.totalorder %v21, 16
    %vm85 = vmor %vm83, %vm84
    %vm86 = vcmp.eq.s32.totalorder %v21, 21
    %vm87 = vmor %vm85, %vm86
    %vm88 = vcmp.eq.s32.totalorder %v21, 26
    %vm89 = vmor %vm87, %vm88
    %vm90 = vcmp.eq.s32.totalorder %v21, 31
    %vm91 = vmor %vm89, %vm90
    %vm92 = vcmp.eq.s32.totalorder %v21, 36
    %vm93 = vmor %vm91, %vm92
    %v94 = vsel %vm93, 1, 0
    %v95 = vcvt.s32.f32 %v94
    %vm96 = vcmp.eq.s32.totalorder %v21, 2
    %vm97 = vcmp.eq.s32.totalorder %v21, 7
    %vm98 = vmor %vm96, %vm97
    %vm99 = vcmp.eq.s32.totalorder %v21, 12
    %vm100 = vmor %vm98, %vm99
    %vm101 = vcmp.eq.s32.totalorder %v21, 17
    %vm102 = vmor %vm100, %vm101
    %vm103 = vcmp.eq.s32.totalorder %v21, 22
    %vm104 = vmor %vm102, %vm103
    %vm105 = vcmp.eq.s32.totalorder %v21, 27
    %vm106 = vmor %vm104, %vm105
    %vm107 = vcmp.eq.s32.totalorder %v21, 32
    %vm108 = vmor %vm106, %vm107
    %vm109 = vcmp.eq.s32.totalorder %v21, 37
    %vm110 = vmor %vm108, %vm109
    %v111 = vsel %vm110, 1, 0
    %v112 = vcvt.s32.f32 %v111
    %vm113 = vcmp.eq.s32.totalorder %v21, 3
    %vm114 = vcmp.eq.s32.totalorder %v21, 8
    %vm115 = vmor %vm113, %vm114
    %vm116 = vcmp.eq.s32.totalorder %v21, 13
    %vm117 = vmor %vm115, %vm116
    %vm118 = vcmp.eq.s32.totalorder %v21, 18
    %vm119 = vmor %vm117, %vm118
    %vm120 = vcmp.eq.s32.totalorder %v21, 23
    %vm121 = vmor %vm119, %vm120
    %vm122 = vcmp.eq.s32.totalorder %v21, 28
    %vm123 = vmor %vm121, %vm122
    %vm124 = vcmp.eq.s32.totalorder %v21, 33
    %vm125 = vmor %vm123, %vm124
    %vm126 = vcmp.eq.s32.totalorder %v21, 38
    %vm127 = vmor %vm125, %vm126
    %v128 = vsel %vm127, 1, 0
    %v129 = vcvt.s32.f32 %v128
    %vm130 = vcmp.eq.s32.totalorder %v21, 4
    %vm131 = vcmp.eq.s32.totalorder %v21, 9
    %vm132 = vmor %vm130, %vm131
    %vm133 = vcmp.eq.s32.totalorder %v21, 14
    %vm134 = vmor %vm132, %vm133
    %vm135 = vcmp.eq.s32.totalorder %v21, 19
    %vm136 = vmor %vm134, %vm135
    %vm137 = vcmp.eq.s32.totalorder %v21, 24
    %vm138 = vmor %vm136, %vm137
    %vm139 = vcmp.eq.s32.totalorder %v21, 29
    %vm140 = vmor %vm138, %vm139
    %vm141 = vcmp.eq.s32.totalorder %v21, 34
    %vm142 = vmor %vm140, %vm141
    %vm143 = vcmp.eq.s32.totalorder %v21, 39
    %vm144 = vmor %vm142, %vm143
    %v145 = vsel %vm144, 1, 0
    %v146 = vcvt.s32.f32 %v145
    %s147 = sld [smem:[#allocation3 + %s19]]
    %s148 = scalar_lea.vmem %s1, %s147
    %v149 = vld [vmem:[%s148] sm:$0x1]
    %v150 = vmul.f32 %v149, %v26
    %v151 = vadd.f32 %v150, 0.0
    %s152 = sadd.s32 %s19, 1
    %s153 = sld [smem:[#allocation3 + %s152]]
    %s154 = scalar_lea.vmem %s1, %s153
    %v155 = vld [vmem:[%s154] sm:$0x1]
    %v156 = vmul.f32 %v155, %v31
    %v157 = vadd.f32 %v151, %v156
    %s158 = sadd.s32 %s19, 2
    %s159 = sld [smem:[#allocation3 + %s158]]
    %s160 = scalar_lea.vmem %s1, %s159
    %v161 = vld [vmem:[%s160] sm:$0x1]
    %v162 = vmul.f32 %v161, %v36
    %v163 = vadd.f32 %v157, %v162
    %s164 = sadd.s32 %s19, 3
    %s165 = sld [smem:[#allocation3 + %s164]]
    %s166 = scalar_lea.vmem %s1, %s165
    %v167 = vld [vmem:[%s166] sm:$0x1]
    %v168 = vmul.f32 %v167, %v41
    %v169 = vadd.f32 %v163, %v168
    %s170 = sadd.s32 %s19, 4
    %s171 = sld [smem:[#allocation3 + %s170]]
    %s172 = scalar_lea.vmem %s1, %s171
    %v173 = vld [vmem:[%s172] sm:$0x1]
    %v174 = vmul.f32 %v173, %v46
    %v175 = vadd.f32 %v169, %v174
    %s176 = sadd.s32 %s19, 5
    %s177 = sld [smem:[#allocation3 + %s176]]
    %s178 = scalar_lea.vmem %s1, %s177
    %v179 = vld [vmem:[%s178] sm:$0x1]
    %v180 = vmul.f32 %v179, %v51
    %v181 = vadd.f32 %v175, %v180
    %s182 = sadd.s32 %s19, 6
    %s183 = sld [smem:[#allocation3 + %s182]]
    %s184 = scalar_lea.vmem %s1, %s183
    %v185 = vld [vmem:[%s184] sm:$0x1]
    %v186 = vmul.f32 %v185, %v56
    %v187 = vadd.f32 %v181, %v186
    %s188 = sadd.s32 %s19, 7
    %s189 = sld [smem:[#allocation3 + %s188]]
    %s190 = scalar_lea.vmem %s1, %s189
    %v191 = vld [vmem:[%s190] sm:$0x1]
    %v192 = vmul.f32 %v191, %v61
    %v193 = vadd.f32 %v187, %v192
    %s194 = sadd.s32 %s19, 8
    %s195 = sld [smem:[#allocation3 + %s194]]
    %s196 = scalar_lea.vmem %s1, %s195
    %v197 = vld [vmem:[%s196] sm:$0x1]
    %v198 = vmul.f32 %v197, %v26
    %v199 = vadd.f32 %v198, 0.0
    %s200 = sadd.s32 %s19, 9
    %s201 = sld [smem:[#allocation3 + %s200]]
    %s202 = scalar_lea.vmem %s1, %s201
    %v203 = vld [vmem:[%s202] sm:$0x1]
    %v204 = vmul.f32 %v203, %v31
    %v205 = vadd.f32 %v199, %v204
    %s206 = sadd.s32 %s19, 10
    %s207 = sld [smem:[#allocation3 + %s206]]
    %s208 = scalar_lea.vmem %s1, %s207
    %v209 = vld [vmem:[%s208] sm:$0x1]
    %v210 = vmul.f32 %v209, %v36
    %v211 = vadd.f32 %v205, %v210
    %s212 = sadd.s32 %s19, 11
    %s213 = sld [smem:[#allocation3 + %s212]]
    %s214 = scalar_lea.vmem %s1, %s213
    %v215 = vld [vmem:[%s214] sm:$0x1]
    %v216 = vmul.f32 %v215, %v41
    %v217 = vadd.f32 %v211, %v216
    %s218 = sadd.s32 %s19, 12
    %s219 = sld [smem:[#allocation3 + %s218]]
    %s220 = scalar_lea.vmem %s1, %s219
    %v221 = vld [vmem:[%s220] sm:$0x1]
    %v222 = vmul.f32 %v221, %v46
    %v223 = vadd.f32 %v217, %v222
    %s224 = sadd.s32 %s19, 13
    %s225 = sld [smem:[#allocation3 + %s224]]
    %s226 = scalar_lea.vmem %s1, %s225
    %v227 = vld [vmem:[%s226] sm:$0x1]
    %v228 = vmul.f32 %v227, %v51
    %v229 = vadd.f32 %v223, %v228
    %s230 = sadd.s32 %s19, 14
    %s231 = sld [smem:[#allocation3 + %s230]]
    %s232 = scalar_lea.vmem %s1, %s231
    %v233 = vld [vmem:[%s232] sm:$0x1]
    %v234 = vmul.f32 %v233, %v56
    %v235 = vadd.f32 %v229, %v234
    %s236 = sadd.s32 %s19, 15
    %s237 = sld [smem:[#allocation3 + %s236]]
    %s238 = scalar_lea.vmem %s1, %s237
    %v239 = vld [vmem:[%s238] sm:$0x1]
    %v240 = vmul.f32 %v239, %v61
    %v241 = vadd.f32 %v235, %v240
    %v243 = vrot.slane %v241, 7
    %vm245 = vcmask 1040384
    %v246 = vsel %vm245, %v193, %v243
    %v247 = vmul.f32 %v246, %v78
    %vm248 = vcmask 320512
    %v249 = vsel %vm248, %v247, 0.0
    %250 = vadd.xlane.f32.xlu0 %v249
    %v251 = vpop.xlane.xlu0 %250
    %v252 = vmul.f32 %v246, %v95
    %v253 = vsel %vm248, %v252, 0.0
    %254 = vadd.xlane.f32.xlu0 %v253
    %v255 = vpop.xlane.xlu0 %254
    %v256 = vmul.f32 %v246, %v112
    %v257 = vsel %vm248, %v256, 0.0
    %258 = vadd.xlane.f32.xlu0 %v257
    %v259 = vpop.xlane.xlu0 %258
    %v260 = vmul.f32 %v246, %v129
    %v261 = vsel %vm248, %v260, 0.0
    %262 = vadd.xlane.f32.xlu0 %v261
    %v263 = vpop.xlane.xlu0 %262
    %v264 = vmul.f32 %v246, %v146
    %v265 = vsel %vm248, %v264, 0.0
    %266 = vadd.xlane.f32.xlu0 %v265
    %v267 = vpop.xlane.xlu0 %266
    %vm268 = vcmask 7168
    %v269 = vsel %vm268, %v251, %v255
    %vm270 = vcmask 15360
    %v271 = vsel %vm270, %v269, %v259
    %vm272 = vcmask 23552
    %v273 = vsel %vm272, %v271, %v263
    %vm274 = vcmask 31744
    %v275 = vsel %vm274, %v273, %v267
    %v276 = vld [vmem:[%s2] sm:$0x1]
    %v278 = vlaneseq
    %v279 = vshrl.u32 %v278, 7
    %v280 = vsub.s32 0, %v279
    %v281 = vrot.slane %v276, %v280
    %v283 = vadd.f32 %v275, %v281
    %vm284 = vcmask 33792
    %v285 = vsel %vm284, %v283, -inf
    %286 = vmax.xlane.f32.xlu0 %v285
    %v287 = vpop.xlane.xlu0 %286
    %v288 = vsub.f32 %v283, %v287
    %v289 = vmul.f32 %v288, 1.442695
    %v290 = vpow.pop %v289
    %v291 = vsel %vm284, %v290, 0.0
    %292 = vadd.xlane.f32.xlu0 %v291
    %v293 = vpop.xlane.xlu0 %292
    %v294 = vrcp.pop %v293
    %v295 = vmul.f32 %v290, %v294
    %296 = vst.msk [vmem:[#allocation4] sm:$0x3] %vm284, %v295
    // Predicated region
    $region10: #{my_model_forward.1} parent=1 // pred_check
      _
    $region11: #{my_model_forward.1} parent=1 // pred_check_branch
      %298 = sbr.rel (0) target = $region13
    $region12: #{my_model_forward.1} parent=1 // pred_region
      %s300 = ssub.s32 32, 32
      %301 = vsyncadd [#allocation5], %s300
      %s303 = sshll.u32 [#allocation4], 4
      %s304 = int_to_ptr.vmem [resolvable:$true] %s303
      %306 = dma.vmem_to_hbm [thread:$0]  %s304, 32, %s3, [#allocation5]
    $region13: #{my_model_forward.1} parent=1 // pred_fallthru
      _
    // Predicated region
    $region14: #{my_model_forward.1} parent=1 // pred_check
      _
    $region15: #{my_model_forward.1} parent=1 // pred_check_branch
      %308 = sbr.rel (0) target = $region17
    $region16: #{my_model_forward.1} parent=1 // pred_region
      %309 = dma.done [#allocation5], 32
    $region17: #{my_model_forward.1} parent=1 // pred_fallthru
      _
    %310 = vsyncpa [#allocation5], 1

</llo_original>
